<compile_context>
chip_gen: v6e
topology: v6e:2x2x1
jax: 0.10.0
libtpu: 0.0.40
codegen_flags: <defaults>
</compile_context>

<pallas_src>
import functools

import jax
import jax.numpy as jnp
from jax.experimental import pallas as pl
from jax.experimental.pallas import tpu as pltpu


def _plddt_kernel(s_ref, ln_w_ref, ln_b_ref,
                  w1_ref, b1_ref, w2_ref, b2_ref, w3_ref, b3_ref,
                  o_ref, *, eps):
    """One (tile_m, c_in) row-tile through the whole head.

    s_ref : (tile_m, c_in)
    ln_*  : (1, c_in)
    w1    : (c_in, c_hidden)    b1 : (1, c_hidden)
    w2    : (c_hidden, c_hidden) b2 : (1, c_hidden)
    w3    : (c_hidden, no_bins)  b3 : (1, no_bins)
    o_ref : (tile_m, no_bins)
    """
    # --- LayerNorm over the channel (lane) dim, in f32 ---
    x = s_ref[...].astype(jnp.float32)
    mean = jnp.mean(x, axis=-1, keepdims=True)
    xc = x - mean
    var = jnp.mean(xc * xc, axis=-1, keepdims=True)
    xn = xc * jax.lax.rsqrt(var + eps)
    xn = xn * ln_w_ref[...].astype(jnp.float32) + ln_b_ref[...].astype(jnp.float32)

    # --- linear_1 + ReLU ---
    h = jnp.dot(xn.astype(w1_ref.dtype), w1_ref[...],
                preferred_element_type=jnp.float32)
    h = jnp.maximum(h + b1_ref[...].astype(jnp.float32), 0.0)

    # --- linear_2 + ReLU ---
    h = jnp.dot(h.astype(w2_ref.dtype), w2_ref[...],
                preferred_element_type=jnp.float32)
    h = jnp.maximum(h + b2_ref[...].astype(jnp.float32), 0.0)

    # --- linear_3 (final; no activation) ---
    out = jnp.dot(h.astype(w3_ref.dtype), w3_ref[...],
                  preferred_element_type=jnp.float32)
    out = out + b3_ref[...].astype(jnp.float32)

    o_ref[...] = out.astype(o_ref.dtype)


def _round_up(x, m):
    return (x + m - 1) // m * m


def per_residue_lddt_ca_predictor(s, params, *, tile_m=256, eps=1e-5):
    """Pallas equivalent of PerResidueLDDTCaPredictor.forward.

    s      : (..., c_in)
    params : dict with ln_w, ln_b (c_in,), w1 (c_in,c_hidden), b1 (c_hidden,),
             w2 (c_hidden,c_hidden), b2 (c_hidden,), w3 (c_hidden,no_bins),
             b3 (no_bins,).
    Returns: (..., no_bins)
    """
    *lead, c_in = s.shape
    c_hidden = params["w1"].shape[1]
    no_bins = params["w3"].shape[1]

    m = 1
    for d in lead:
        m *= d
    s2 = s.reshape(m, c_in)

    # Large, sublane-aligned row tiles; pad rows so the grid divides exactly.
    tile_m = min(tile_m, _round_up(m, 8))
    pad = (-m) % tile_m
    if pad:
        s2 = jnp.pad(s2, ((0, pad), (0, 0)))
    mp = s2.shape[0]
    grid = (mp // tile_m,)

    ln_w = params["ln_w"].reshape(1, c_in)
    ln_b = params["ln_b"].reshape(1, c_in)
    b1 = params["b1"].reshape(1, c_hidden)
    b2 = params["b2"].reshape(1, c_hidden)
    b3 = params["b3"].reshape(1, no_bins)

    def full(shape):
        # Whole array resident in VMEM; constant block index across the grid.
        return pl.BlockSpec(shape, lambda i: (0, 0))

    out = pl.pallas_call(
        functools.partial(_plddt_kernel, eps=eps),
        out_shape=jax.ShapeDtypeStruct((mp, no_bins), s.dtype),
        grid=grid,
        in_specs=[
            pl.BlockSpec((tile_m, c_in), lambda i: (i, 0)),
            full((1, c_in)), full((1, c_in)),
            full((c_in, c_hidden)), full((1, c_hidden)),
            full((c_hidden, c_hidden)), full((1, c_hidden)),
            full((c_hidden, no_bins)), full((1, no_bins)),
        ],
        out_specs=pl.BlockSpec((tile_m, no_bins), lambda i: (i, 0)),
        compiler_params=pltpu.CompilerParams(
            dimension_semantics=("parallel",)),
    )(s2, ln_w, ln_b, params["w1"], b1, params["w2"], b2, params["w3"], b3)

    if pad:
        out = out[:m]
    return out.reshape(*lead, no_bins)


# ----------------------------- reference / test -----------------------------

def _reference(s, params, eps=1e-5):
    hp = jax.lax.Precision.HIGHEST
    mean = jnp.mean(s, axis=-1, keepdims=True)
    var = jnp.mean((s - mean) ** 2, axis=-1, keepdims=True)
    x = (s - mean) / jnp.sqrt(var + eps)
    x = x * params["ln_w"] + params["ln_b"]
    x = jax.nn.relu(jnp.dot(x, params["w1"], precision=hp) + params["b1"])
    x = jax.nn.relu(jnp.dot(x, params["w2"], precision=hp) + params["b2"])
    return jnp.dot(x, params["w3"], precision=hp) + params["b3"]


def make_params(key, c_in, c_hidden, no_bins):
    ks = jax.random.split(key, 8)
    return {
        "ln_w": 1.0 + 0.1 * jax.random.normal(ks[0], (c_in,), jnp.float32),
        "ln_b": 0.1 * jax.random.normal(ks[1], (c_in,), jnp.float32),
        "w1": jax.random.normal(ks[2], (c_in, c_hidden), jnp.float32) * 0.05,
        "b1": jax.random.normal(ks[3], (c_hidden,), jnp.float32) * 0.05,
        "w2": jax.random.normal(ks[4], (c_hidden, c_hidden), jnp.float32) * 0.05,
        "b2": jax.random.normal(ks[5], (c_hidden,), jnp.float32) * 0.05,
        "w3": jax.random.normal(ks[6], (c_hidden, no_bins), jnp.float32) * 0.05,
        "b3": jax.random.normal(ks[7], (no_bins,), jnp.float32) * 0.05,
    }


if __name__ == "__main__":
    # Small deterministic config. N is deliberately NOT a multiple of the tile
    # so the padding / multi-step-grid path is exercised.
    B, N = 2, 40
    C_IN, C_HIDDEN, NO_BINS = 64, 128, 64

    key = jax.random.PRNGKey(0)
    key, ks, kp = jax.random.split(key, 3)
    s = jax.random.normal(ks, (B, N, C_IN), jnp.float32)
    params = make_params(kp, C_IN, C_HIDDEN, NO_BINS)

    out = per_residue_lddt_ca_predictor(s, params, tile_m=32)
    out = jax.block_until_ready(out)

    ref = _reference(s, params)
    assert out.shape == ref.shape, (out.shape, ref.shape)
    err = float(jnp.max(jnp.abs(out - ref)))
    scale = float(jnp.max(jnp.abs(ref))) + 1e-6
    assert err / scale < 1e-2, (err, scale)

    print("KERNEL_OK")
</pallas_src>

<mosaic_0001>
module attributes {stable_mosaic.version = 11 : i64} {
  func.func @_plddt_kernel(%arg0: i32, %arg1: memref<32x64xf32, #tpu.memory_space<vmem>>, %arg2: memref<1x64xf32, #tpu.memory_space<vmem>>, %arg3: memref<1x64xf32, #tpu.memory_space<vmem>>, %arg4: memref<64x128xf32, #tpu.memory_space<vmem>>, %arg5: memref<1x128xf32, #tpu.memory_space<vmem>>, %arg6: memref<128x128xf32, #tpu.memory_space<vmem>>, %arg7: memref<1x128xf32, #tpu.memory_space<vmem>>, %arg8: memref<128x64xf32, #tpu.memory_space<vmem>>, %arg9: memref<1x64xf32, #tpu.memory_space<vmem>>, %arg10: memref<32x64xf32, #tpu.memory_space<vmem>>) attributes {dimension_semantics = [#tpu.dimension_semantics<parallel>], iteration_bounds = array<i64: 3>, scalar_prefetch = 0 : i64, scratch_operands = 0 : i64, tpu.core_type = #tpu.core_type<tc>, window_params = [{transform_indices = @transform_0, window_bounds = array<i64: 32, 64>}, {pipeline_mode = #tpu.pipeline_mode<synchronous>, transform_indices = @transform_1, window_bounds = array<i64: 1, 64>}, {pipeline_mode = #tpu.pipeline_mode<synchronous>, transform_indices = @transform_2, window_bounds = array<i64: 1, 64>}, {pipeline_mode = #tpu.pipeline_mode<synchronous>, transform_indices = @transform_3, window_bounds = array<i64: 64, 128>}, {pipeline_mode = #tpu.pipeline_mode<synchronous>, transform_indices = @transform_4, window_bounds = array<i64: 1, 128>}, {pipeline_mode = #tpu.pipeline_mode<synchronous>, transform_indices = @transform_5, window_bounds = array<i64: 128, 128>}, {pipeline_mode = #tpu.pipeline_mode<synchronous>, transform_indices = @transform_6, window_bounds = array<i64: 1, 128>}, {pipeline_mode = #tpu.pipeline_mode<synchronous>, transform_indices = @transform_7, window_bounds = array<i64: 128, 64>}, {pipeline_mode = #tpu.pipeline_mode<synchronous>, transform_indices = @transform_8, window_bounds = array<i64: 1, 64>}, {transform_indices = @transform_9, window_bounds = array<i64: 32, 64>}]} {
    %c0 = arith.constant 0 : index
    %c0_0 = arith.constant 0 : index
    %0 = vector.load %arg1[%c0, %c0_0] : memref<32x64xf32, #tpu.memory_space<vmem>>, vector<32x64xf32>
    %cst = arith.constant dense<0.000000e+00> : vector<32xf32>
    %1 = vector.multi_reduction <add>, %0, %cst [1] : vector<32x64xf32> to vector<32xf32>
    %2 = vector.shape_cast %1 : vector<32xf32> to vector<32x1xf32>
    %cst_1 = arith.constant 6.400000e+01 : f32
    %3 = vector.broadcast %cst_1 : f32 to vector<32x1xf32>
    %4 = arith.divf %2, %3 : vector<32x1xf32>
    %5 = vector.broadcast %4 : vector<32x1xf32> to vector<32x64xf32>
    %6 = arith.subf %0, %5 : vector<32x64xf32>
    %7 = arith.mulf %6, %6 : vector<32x64xf32>
    %cst_2 = arith.constant dense<0.000000e+00> : vector<32xf32>
    %8 = vector.multi_reduction <add>, %7, %cst_2 [1] : vector<32x64xf32> to vector<32xf32>
    %9 = vector.shape_cast %8 : vector<32xf32> to vector<32x1xf32>
    %cst_3 = arith.constant 6.400000e+01 : f32
    %10 = vector.broadcast %cst_3 : f32 to vector<32x1xf32>
    %11 = arith.divf %9, %10 : vector<32x1xf32>
    %cst_4 = arith.constant 9.99999974E-6 : f32
    %12 = vector.broadcast %cst_4 : f32 to vector<32x1xf32>
    %13 = arith.addf %11, %12 : vector<32x1xf32>
    %14 = math.rsqrt %13 : vector<32x1xf32>
    %15 = vector.broadcast %14 : vector<32x1xf32> to vector<32x64xf32>
    %16 = arith.mulf %6, %15 : vector<32x64xf32>
    %c0_5 = arith.constant 0 : index
    %c0_6 = arith.constant 0 : index
    %17 = vector.load %arg2[%c0_5, %c0_6] : memref<1x64xf32, #tpu.memory_space<vmem>>, vector<1x64xf32>
    %18 = vector.broadcast %17 : vector<1x64xf32> to vector<32x64xf32>
    %19 = arith.mulf %16, %18 : vector<32x64xf32>
    %c0_7 = arith.constant 0 : index
    %c0_8 = arith.constant 0 : index
    %20 = vector.load %arg3[%c0_7, %c0_8] : memref<1x64xf32, #tpu.memory_space<vmem>>, vector<1x64xf32>
    %21 = vector.broadcast %20 : vector<1x64xf32> to vector<32x64xf32>
    %22 = arith.addf %19, %21 : vector<32x64xf32>
    %c0_9 = arith.constant 0 : index
    %c0_10 = arith.constant 0 : index
    %23 = vector.load %arg4[%c0_9, %c0_10] : memref<64x128xf32, #tpu.memory_space<vmem>>, vector<64x128xf32>
    %cst_11 = arith.constant dense<0.000000e+00> : vector<32x128xf32>
    %24 = tpu.matmul %22, %23, %cst_11 {dimension_numbers = #tpu.dot_dimension_numbers<[1], [0], [0], [1], [0, 0, 1, 1], [], []>} : vector<32x64xf32>, vector<64x128xf32>, vector<32x128xf32> -> vector<32x128xf32>
    %c0_12 = arith.constant 0 : index
    %c0_13 = arith.constant 0 : index
    %25 = vector.load %arg5[%c0_12, %c0_13] : memref<1x128xf32, #tpu.memory_space<vmem>>, vector<1x128xf32>
    %26 = vector.broadcast %25 : vector<1x128xf32> to vector<32x128xf32>
    %27 = arith.addf %24, %26 : vector<32x128xf32>
    %cst_14 = arith.constant 0.000000e+00 : f32
    %28 = vector.broadcast %cst_14 : f32 to vector<32x128xf32>
    %29 = arith.maximumf %27, %28 : vector<32x128xf32>
    %c0_15 = arith.constant 0 : index
    %c0_16 = arith.constant 0 : index
    %30 = vector.load %arg6[%c0_15, %c0_16] : memref<128x128xf32, #tpu.memory_space<vmem>>, vector<128x128xf32>
    %cst_17 = arith.constant dense<0.000000e+00> : vector<32x128xf32>
    %31 = tpu.matmul %29, %30, %cst_17 {dimension_numbers = #tpu.dot_dimension_numbers<[1], [0], [0], [1], [0, 0, 1, 1], [], []>} : vector<32x128xf32>, vector<128x128xf32>, vector<32x128xf32> -> vector<32x128xf32>
    %c0_18 = arith.constant 0 : index
    %c0_19 = arith.constant 0 : index
    %32 = vector.load %arg7[%c0_18, %c0_19] : memref<1x128xf32, #tpu.memory_space<vmem>>, vector<1x128xf32>
    %33 = vector.broadcast %32 : vector<1x128xf32> to vector<32x128xf32>
    %34 = arith.addf %31, %33 : vector<32x128xf32>
    %cst_20 = arith.constant 0.000000e+00 : f32
    %35 = vector.broadcast %cst_20 : f32 to vector<32x128xf32>
    %36 = arith.maximumf %34, %35 : vector<32x128xf32>
    %c0_21 = arith.constant 0 : index
    %c0_22 = arith.constant 0 : index
    %37 = vector.load %arg8[%c0_21, %c0_22] : memref<128x64xf32, #tpu.memory_space<vmem>>, vector<128x64xf32>
    %cst_23 = arith.constant dense<0.000000e+00> : vector<32x64xf32>
    %38 = tpu.matmul %36, %37, %cst_23 {dimension_numbers = #tpu.dot_dimension_numbers<[1], [0], [0], [1], [0, 0, 1, 1], [], []>} : vector<32x128xf32>, vector<128x64xf32>, vector<32x64xf32> -> vector<32x64xf32>
    %c0_24 = arith.constant 0 : index
    %c0_25 = arith.constant 0 : index
    %39 = vector.load %arg9[%c0_24, %c0_25] : memref<1x64xf32, #tpu.memory_space<vmem>>, vector<1x64xf32>
    %40 = vector.broadcast %39 : vector<1x64xf32> to vector<32x64xf32>
    %41 = arith.addf %38, %40 : vector<32x64xf32>
    %c0_26 = arith.constant 0 : index
    %c0_27 = arith.constant 0 : index
    %42 = vector.load %arg10[%c0_26, %c0_27] : memref<32x64xf32, #tpu.memory_space<vmem>>, vector<32x64xf32>
    tpu.vector_store %arg10[%c0_26, %c0_27], %41 {strides = array<i32>} : memref<32x64xf32, #tpu.memory_space<vmem>>, vector<32x64xf32>,
    return
  }
  func.func @transform_0(%arg0: i32) -> (i32, i32) {
    %c0_i32 = arith.constant 0 : i32
    %c0_i32_0 = arith.constant 0 : i32
    return %arg0, %c0_i32 : i32, i32
  }
  func.func @transform_1(%arg0: i32) -> (i32, i32) {
    %c0_i32 = arith.constant 0 : i32
    %c0_i32_0 = arith.constant 0 : i32
    %c0_i32_1 = arith.constant 0 : i32
    return %c0_i32, %c0_i32_0 : i32, i32
  }
  func.func @transform_2(%arg0: i32) -> (i32, i32) {
    %c0_i32 = arith.constant 0 : i32
    %c0_i32_0 = arith.constant 0 : i32
    %c0_i32_1 = arith.constant 0 : i32
    return %c0_i32, %c0_i32_0 : i32, i32
  }
  func.func @transform_3(%arg0: i32) -> (i32, i32) {
    %c0_i32 = arith.constant 0 : i32
    %c0_i32_0 = arith.constant 0 : i32
    %c0_i32_1 = arith.constant 0 : i32
    return %c0_i32, %c0_i32_0 : i32, i32
  }
  func.func @transform_4(%arg0: i32) -> (i32, i32) {
    %c0_i32 = arith.constant 0 : i32
    %c0_i32_0 = arith.constant 0 : i32
    %c0_i32_1 = arith.constant 0 : i32
    return %c0_i32, %c0_i32_0 : i32, i32
  }
  func.func @transform_5(%arg0: i32) -> (i32, i32) {
    %c0_i32 = arith.constant 0 : i32
    %c0_i32_0 = arith.constant 0 : i32
    %c0_i32_1 = arith.constant 0 : i32
    return %c0_i32, %c0_i32_0 : i32, i32
  }
  func.func @transform_6(%arg0: i32) -> (i32, i32) {
    %c0_i32 = arith.constant 0 : i32
    %c0_i32_0 = arith.constant 0 : i32
    %c0_i32_1 = arith.constant 0 : i32
    return %c0_i32, %c0_i32_0 : i32, i32
  }
  func.func @transform_7(%arg0: i32) -> (i32, i32) {
    %c0_i32 = arith.constant 0 : i32
    %c0_i32_0 = arith.constant 0 : i32
    %c0_i32_1 = arith.constant 0 : i32
    return %c0_i32, %c0_i32_0 : i32, i32
  }
  func.func @transform_8(%arg0: i32) -> (i32, i32) {
    %c0_i32 = arith.constant 0 : i32
    %c0_i32_0 = arith.constant 0 : i32
    %c0_i32_1 = arith.constant 0 : i32
    return %c0_i32, %c0_i32_0 : i32, i32
  }
  func.func @transform_9(%arg0: i32) -> (i32, i32) {
    %c0_i32 = arith.constant 0 : i32
    %c0_i32_0 = arith.constant 0 : i32
    return %arg0, %c0_i32 : i32, i32
  }
}

</mosaic_0001>

<llo_original>
// kernel: tpu_custom_call.1
$region0: #{tpu_custom_call.1}
  #allocation0 [shape = 'u32[]', space=smem, size = 0x4, offset = 0x4, fixed_abs, tag = 'smem constant byte address 0x4 - core index']
  #allocation1 [shape = 'u32[144,128]{1,0:T(1,128)}', space=vmem, size = 0x12000, scoped, tag = 'internal scratch']
  %s0 = inlined_call_operand.vmem [shape: f32[96,64], index: 0, kind: input, shape index: {}]
  %s1 = inlined_call_operand.vmem [shape: f32[1,64], index: 1, kind: input, shape index: {}]
  %s2 = inlined_call_operand.vmem [shape: f32[1,64], index: 2, kind: input, shape index: {}]
  %s3 = inlined_call_operand.vmem [shape: f32[64,128], index: 3, kind: input, shape index: {}]
  %s4 = inlined_call_operand.vmem [shape: f32[1,128], index: 4, kind: input, shape index: {}]
  %s5 = inlined_call_operand.vmem [shape: f32[128,128], index: 5, kind: input, shape index: {}]
  %s6 = inlined_call_operand.vmem [shape: f32[1,128], index: 6, kind: input, shape index: {}]
  %s7 = inlined_call_operand.vmem [shape: f32[128,64], index: 7, kind: input, shape index: {}]
  %s8 = inlined_call_operand.vmem [shape: f32[1,64], index: 8, kind: input, shape index: {}]
  %s9 = inlined_call_operand.vmem [shape: f32[96,64], index: 9, kind: output, shape index: {}]
  %s10 = sld [smem:[#allocation0]]
  $region69: #{tpu_custom_call.1} parent=0
    _
  %s12 = ssub.s32 1, %s10
  %s13 = scalar_select 0, %s12, %s10
  loop: start=0, step=1, limit=5
  $region2: #{tpu_custom_call.1} parent=0 // loop_pre_header
    _
  $region3: #{tpu_custom_call.1} parent=0 // loop_header
    %s15 = sphi 0, %s19
    %p16 = scmp.ge.s32.totalorder %s15, 5
    %s25 = sphi 0, %s27
    %s28 = sphi 0, %s25
    %s29 = sphi 0, %s28
    %s45 = sphi 0, %s29
    %s49 = sphi 0, %s49
    %s51 = sphi 0, %s49
    %s52 = sphi 0, %s51
    %s66 = sphi 0, %s52
    %s70 = sphi 0, %s70
    %s72 = sphi 0, %s70
    %s73 = sphi 0, %s72
    %s87 = sphi 0, %s73
    %s91 = sphi 0, %s91
    %s93 = sphi 0, %s91
    %s94 = sphi 0, %s93
    %s108 = sphi 0, %s94
    %s112 = sphi 0, %s112
    %s114 = sphi 0, %s112
    %s115 = sphi 0, %s114
    %s129 = sphi 0, %s115
    %s133 = sphi 0, %s133
    %s135 = sphi 0, %s133
    %s136 = sphi 0, %s135
    %s150 = sphi 0, %s136
    %s154 = sphi 0, %s154
    %s156 = sphi 0, %s154
    %s157 = sphi 0, %s156
    %s171 = sphi 0, %s157
    %s175 = sphi 0, %s175
    %s177 = sphi 0, %s175
    %s178 = sphi 0, %s177
    %s192 = sphi 0, %s178
    %s196 = sphi 0, %s196
    %s198 = sphi 0, %s196
    %s199 = sphi 0, %s198
    %s213 = sphi 0, %s199
    %s219 = sphi 0, %s221
    %s222 = sphi 0, %s219
    %s223 = sphi 0, %s222
    %s239 = sphi 0, %s223
  $region4: #{tpu_custom_call.1} parent=0 // loop_header_branch
    %18 = sbr.rel (%p16) target = $region8
  $region5: #{tpu_custom_call.1} parent=0 // loop_body
    %s20 = ssub.s32 %s15, 1
    %s21 = ssub.s32 %s15, 2
    %s22 = sadd.s32 %s15, 1
    %s23 = ssub.s32 %s15, %s22
    %p24 = scmp.eq.s32.totalorder %s23, 0
    %s26 = sadd.s32 %s25, 1
    %s27 = scalar_select %p24, %s25, %s26
    %p30 = pneg %p24
    %p31 = scmp.eq.s32.totalorder %s15, 2
    %p32 = por %p30, %p31
    %p33 = scmp.ne.s32.totalorder %s25, %s28
    %p34 = scmp.eq.s32.totalorder %s15, 0
    %p35 = por %p33, %p34
    %p36 = scmp.ne.s32.totalorder %s25, %s28
    %p37 = scmp.eq.s32.totalorder %s20, 2
    %p38 = por %p36, %p37
    %p39 = scmp.ne.s32.totalorder %s28, %s29
    %p40 = scmp.eq.s32.totalorder %s20, 0
    %p41 = por %p39, %p40
    %p42 = scmp.ne.s32.totalorder %s28, %s29
    %p43 = scmp.eq.s32.totalorder %s21, 2
    %p44 = por %p42, %p43
    %p46 = scmp.ne.s32.totalorder %s29, %s45
    %p47 = scmp.eq.s32.totalorder %s21, 0
    %p48 = por %p46, %p47
    %s50 = sadd.s32 %s49, 1
    %p53 = scmp.eq.s32.totalorder %s15, 2
    %p54 = scmp.ne.s32.totalorder %s49, %s51
    %p55 = scmp.eq.s32.totalorder %s15, 0
    %p56 = por %p54, %p55
    %p57 = scmp.ne.s32.totalorder %s49, %s51
    %p58 = scmp.eq.s32.totalorder %s20, 2
    %p59 = por %p57, %p58
    %p60 = scmp.ne.s32.totalorder %s51, %s52
    %p61 = scmp.eq.s32.totalorder %s20, 0
    %p62 = por %p60, %p61
    %p63 = scmp.ne.s32.totalorder %s51, %s52
    %p64 = scmp.eq.s32.totalorder %s21, 2
    %p65 = por %p63, %p64
    %p67 = scmp.ne.s32.totalorder %s52, %s66
    %p68 = scmp.eq.s32.totalorder %s21, 0
    %p69 = por %p67, %p68
    %s71 = sadd.s32 %s70, 1
    %p74 = scmp.eq.s32.totalorder %s15, 2
    %p75 = scmp.ne.s32.totalorder %s70, %s72
    %p76 = scmp.eq.s32.totalorder %s15, 0
    %p77 = por %p75, %p76
    %p78 = scmp.ne.s32.totalorder %s70, %s72
    %p79 = scmp.eq.s32.totalorder %s20, 2
    %p80 = por %p78, %p79
    %p81 = scmp.ne.s32.totalorder %s72, %s73
    %p82 = scmp.eq.s32.totalorder %s20, 0
    %p83 = por %p81, %p82
    %p84 = scmp.ne.s32.totalorder %s72, %s73
    %p85 = scmp.eq.s32.totalorder %s21, 2
    %p86 = por %p84, %p85
    %p88 = scmp.ne.s32.totalorder %s73, %s87
    %p89 = scmp.eq.s32.totalorder %s21, 0
    %p90 = por %p88, %p89
    %s92 = sadd.s32 %s91, 1
    %p95 = scmp.eq.s32.totalorder %s15, 2
    %p96 = scmp.ne.s32.totalorder %s91, %s93
    %p97 = scmp.eq.s32.totalorder %s15, 0
    %p98 = por %p96, %p97
    %p99 = scmp.ne.s32.totalorder %s91, %s93
    %p100 = scmp.eq.s32.totalorder %s20, 2
    %p101 = por %p99, %p100
    %p102 = scmp.ne.s32.totalorder %s93, %s94
    %p103 = scmp.eq.s32.totalorder %s20, 0
    %p104 = por %p102, %p103
    %p105 = scmp.ne.s32.totalorder %s93, %s94
    %p106 = scmp.eq.s32.totalorder %s21, 2
    %p107 = por %p105, %p106
    %p109 = scmp.ne.s32.totalorder %s94, %s108
    %p110 = scmp.eq.s32.totalorder %s21, 0
    %p111 = por %p109, %p110
    %s113 = sadd.s32 %s112, 1
    %p116 = scmp.eq.s32.totalorder %s15, 2
    %p117 = scmp.ne.s32.totalorder %s112, %s114
    %p118 = scmp.eq.s32.totalorder %s15, 0
    %p119 = por %p117, %p118
    %p120 = scmp.ne.s32.totalorder %s112, %s114
    %p121 = scmp.eq.s32.totalorder %s20, 2
    %p122 = por %p120, %p121
    %p123 = scmp.ne.s32.totalorder %s114, %s115
    %p124 = scmp.eq.s32.totalorder %s20, 0
    %p125 = por %p123, %p124
    %p126 = scmp.ne.s32.totalorder %s114, %s115
    %p127 = scmp.eq.s32.totalorder %s21, 2
    %p128 = por %p126, %p127
    %p130 = scmp.ne.s32.totalorder %s115, %s129
    %p131 = scmp.eq.s32.totalorder %s21, 0
    %p132 = por %p130, %p131
    %s134 = sadd.s32 %s133, 1
    %p137 = scmp.eq.s32.totalorder %s15, 2
    %p138 = scmp.ne.s32.totalorder %s133, %s135
    %p139 = scmp.eq.s32.totalorder %s15, 0
    %p140 = por %p138, %p139
    %p141 = scmp.ne.s32.totalorder %s133, %s135
    %p142 = scmp.eq.s32.totalorder %s20, 2
    %p143 = por %p141, %p142
    %p144 = scmp.ne.s32.totalorder %s135, %s136
    %p145 = scmp.eq.s32.totalorder %s20, 0
    %p146 = por %p144, %p145
    %p147 = scmp.ne.s32.totalorder %s135, %s136
    %p148 = scmp.eq.s32.totalorder %s21, 2
    %p149 = por %p147, %p148
    %p151 = scmp.ne.s32.totalorder %s136, %s150
    %p152 = scmp.eq.s32.totalorder %s21, 0
    %p153 = por %p151, %p152
    %s155 = sadd.s32 %s154, 1
    %p158 = scmp.eq.s32.totalorder %s15, 2
    %p159 = scmp.ne.s32.totalorder %s154, %s156
    %p160 = scmp.eq.s32.totalorder %s15, 0
    %p161 = por %p159, %p160
    %p162 = scmp.ne.s32.totalorder %s154, %s156
    %p163 = scmp.eq.s32.totalorder %s20, 2
    %p164 = por %p162, %p163
    %p165 = scmp.ne.s32.totalorder %s156, %s157
    %p166 = scmp.eq.s32.totalorder %s20, 0
    %p167 = por %p165, %p166
    %p168 = scmp.ne.s32.totalorder %s156, %s157
    %p169 = scmp.eq.s32.totalorder %s21, 2
    %p170 = por %p168, %p169
    %p172 = scmp.ne.s32.totalorder %s157, %s171
    %p173 = scmp.eq.s32.totalorder %s21, 0
    %p174 = por %p172, %p173
    %s176 = sadd.s32 %s175, 1
    %p179 = scmp.eq.s32.totalorder %s15, 2
    %p180 = scmp.ne.s32.totalorder %s175, %s177
    %p181 = scmp.eq.s32.totalorder %s15, 0
    %p182 = por %p180, %p181
    %p183 = scmp.ne.s32.totalorder %s175, %s177
    %p184 = scmp.eq.s32.totalorder %s20, 2
    %p185 = por %p183, %p184
    %p186 = scmp.ne.s32.totalorder %s177, %s178
    %p187 = scmp.eq.s32.totalorder %s20, 0
    %p188 = por %p186, %p187
    %p189 = scmp.ne.s32.totalorder %s177, %s178
    %p190 = scmp.eq.s32.totalorder %s21, 2
    %p191 = por %p189, %p190
    %p193 = scmp.ne.s32.totalorder %s178, %s192
    %p194 = scmp.eq.s32.totalorder %s21, 0
    %p195 = por %p193, %p194
    %s197 = sadd.s32 %s196, 1
    %p200 = scmp.eq.s32.totalorder %s15, 2
    %p201 = scmp.ne.s32.totalorder %s196, %s198
    %p202 = scmp.eq.s32.totalorder %s15, 0
    %p203 = por %p201, %p202
    %p204 = scmp.ne.s32.totalorder %s196, %s198
    %p205 = scmp.eq.s32.totalorder %s20, 2
    %p206 = por %p204, %p205
    %p207 = scmp.ne.s32.totalorder %s198, %s199
    %p208 = scmp.eq.s32.totalorder %s20, 0
    %p209 = por %p207, %p208
    %p210 = scmp.ne.s32.totalorder %s198, %s199
    %p211 = scmp.eq.s32.totalorder %s21, 2
    %p212 = por %p210, %p211
    %p214 = scmp.ne.s32.totalorder %s199, %s213
    %p215 = scmp.eq.s32.totalorder %s21, 0
    %p216 = por %p214, %p215
    %s217 = ssub.s32 %s15, %s22
    %p218 = scmp.eq.s32.totalorder %s217, 0
    %s220 = sadd.s32 %s219, 1
    %s221 = scalar_select %p218, %s219, %s220
    %p224 = pneg %p218
    %p225 = scmp.eq.s32.totalorder %s15, 2
    %p226 = por %p224, %p225
    %p227 = scmp.ne.s32.totalorder %s219, %s222
    %p228 = scmp.eq.s32.totalorder %s15, 0
    %p229 = por %p227, %p228
    %p230 = scmp.ne.s32.totalorder %s219, %s222
    %p231 = scmp.eq.s32.totalorder %s20, 2
    %p232 = por %p230, %p231
    %p233 = scmp.ne.s32.totalorder %s222, %s223
    %p234 = scmp.eq.s32.totalorder %s20, 0
    %p235 = por %p233, %p234
    %p236 = scmp.ne.s32.totalorder %s222, %s223
    %p237 = scmp.eq.s32.totalorder %s21, 2
    %p238 = por %p236, %p237
    %p240 = scmp.ne.s32.totalorder %s223, %s239
    %p241 = scmp.eq.s32.totalorder %s21, 0
    %p242 = por %p240, %p241
    %p243 = scmp.le.s32.totalorder 1, %s15
    %p244 = scmp.lt.s32.totalorder %s15, 4
    %p245 = pnand %p243, %p244
    %p246 = pneg %p245
    // Predicated region
    $region9: #{tpu_custom_call.1} parent=5 // pred_check
      _
    $region10: #{tpu_custom_call.1} parent=5 // pred_check_branch
      %248 = sbr.rel (%p245) target = $region12
    $region11: #{tpu_custom_call.1} parent=5 // pred_region
      %s249 = ssub.s32 %s15, 1
      // Predicated region
      $region13: #{tpu_custom_call.1} parent=11 // pred_check
        %p250 = pneg %p62
      $region14: #{tpu_custom_call.1} parent=11 // pred_check_branch
        %252 = sbr.rel (%p250) target = $region16
      $region15: #{tpu_custom_call.1} parent=11 // pred_region
        _
      $region16: #{tpu_custom_call.1} parent=11 // pred_fallthru
        _
      // Predicated region
      $region17: #{tpu_custom_call.1} parent=11 // pred_check
        %p253 = pneg %p83
      $region18: #{tpu_custom_call.1} parent=11 // pred_check_branch
        %255 = sbr.rel (%p253) target = $region20
      $region19: #{tpu_custom_call.1} parent=11 // pred_region
        _
      $region20: #{tpu_custom_call.1} parent=11 // pred_fallthru
        _
      // Predicated region
      $region21: #{tpu_custom_call.1} parent=11 // pred_check
        %p256 = pneg %p104
      $region22: #{tpu_custom_call.1} parent=11 // pred_check_branch
        %258 = sbr.rel (%p256) target = $region24
      $region23: #{tpu_custom_call.1} parent=11 // pred_region
        _
      $region24: #{tpu_custom_call.1} parent=11 // pred_fallthru
        _
      // Predicated region
      $region25: #{tpu_custom_call.1} parent=11 // pred_check
        %p259 = pneg %p125
      $region26: #{tpu_custom_call.1} parent=11 // pred_check_branch
        %261 = sbr.rel (%p259) target = $region28
      $region27: #{tpu_custom_call.1} parent=11 // pred_region
        _
      $region28: #{tpu_custom_call.1} parent=11 // pred_fallthru
        _
      // Predicated region
      $region29: #{tpu_custom_call.1} parent=11 // pred_check
        %p262 = pneg %p146
      $region30: #{tpu_custom_call.1} parent=11 // pred_check_branch
        %264 = sbr.rel (%p262) target = $region32
      $region31: #{tpu_custom_call.1} parent=11 // pred_region
        _
      $region32: #{tpu_custom_call.1} parent=11 // pred_fallthru
        _
      // Predicated region
      $region33: #{tpu_custom_call.1} parent=11 // pred_check
        %p265 = pneg %p167
      $region34: #{tpu_custom_call.1} parent=11 // pred_check_branch
        %267 = sbr.rel (%p265) target = $region36
      $region35: #{tpu_custom_call.1} parent=11 // pred_region
        _
      $region36: #{tpu_custom_call.1} parent=11 // pred_fallthru
        _
      // Predicated region
      $region37: #{tpu_custom_call.1} parent=11 // pred_check
        %p268 = pneg %p188
      $region38: #{tpu_custom_call.1} parent=11 // pred_check_branch
        %270 = sbr.rel (%p268) target = $region40
      $region39: #{tpu_custom_call.1} parent=11 // pred_region
        _
      $region40: #{tpu_custom_call.1} parent=11 // pred_fallthru
        _
      // Predicated region
      $region41: #{tpu_custom_call.1} parent=11 // pred_check
        %p271 = pneg %p209
      $region42: #{tpu_custom_call.1} parent=11 // pred_check_branch
        %273 = sbr.rel (%p271) target = $region44
      $region43: #{tpu_custom_call.1} parent=11 // pred_region
        _
      $region44: #{tpu_custom_call.1} parent=11 // pred_fallthru
        _
    $region12: #{tpu_custom_call.1} parent=5 // pred_fallthru
      _
    %p274 = scmp.lt.s32.totalorder %s15, 3
    // Predicated region
    $region45: #{tpu_custom_call.1} parent=5 // pred_check
      %p275 = pneg %p274
    $region46: #{tpu_custom_call.1} parent=5 // pred_check_branch
      %277 = sbr.rel (%p275) target = $region48
    $region47: #{tpu_custom_call.1} parent=5 // pred_region
      // Predicated region
      $region49: #{tpu_custom_call.1} parent=47 // pred_check
        %p278 = pneg %p35
      $region50: #{tpu_custom_call.1} parent=47 // pred_check_branch
        %280 = sbr.rel (%p278) target = $region52
      $region51: #{tpu_custom_call.1} parent=47 // pred_region
        %s281 = smul.u32 4, %s15
        %p282 = scmp.lt.s32.totalorder %s281, 11
        %s283 = scalar_select %p282, %s281, 11
        %s284 = smul.addr %s283, 8
        %s285 = scalar_lea.vmem %s0, %s284
        %s286 = smul.u32 4, %s15
      $region52: #{tpu_custom_call.1} parent=47 // pred_fallthru
        _
    $region48: #{tpu_custom_call.1} parent=5 // pred_fallthru
      _
    %p287 = scmp.le.s32.totalorder 1, %s15
    %p288 = scmp.lt.s32.totalorder %s15, 4
    %p289 = pnand %p287, %p288
    %p290 = pneg %p289
    // Predicated region
    $region53: #{tpu_custom_call.1} parent=5 // pred_check
      _
    $region54: #{tpu_custom_call.1} parent=5 // pred_check_branch
      %292 = sbr.rel (%p289) target = $region56
    $region55: #{tpu_custom_call.1} parent=5 // pred_region
      %s293 = ssub.s32 %s15, 1
      %s294 = smul.u32 4, %s20
      %p295 = scmp.lt.s32.totalorder %s294, 11
      %s296 = scalar_select %p295, %s294, 11
      %s297 = smul.addr %s296, 8
      %s298 = scalar_lea.vmem %s0, %s297
      %p299 = pneg %p41
      %p300 = pneg %p38
      %p301 = pneg %p62
      %p302 = pneg %p59
      %p303 = pneg %p83
      %p304 = pneg %p80
      %p305 = pneg %p104
      %p306 = pneg %p101
      %p307 = pneg %p125
      %p308 = pneg %p122
      %p309 = pneg %p146
      %p310 = pneg %p143
      %p311 = pneg %p167
      %p312 = pneg %p164
      %p313 = pneg %p188
      %p314 = pneg %p185
      %p315 = pneg %p209
      %p316 = pneg %p206
      %p317 = pneg %p235
      %p318 = pneg %p232
      %s319 = smul.u32 4, %s20
      %p320 = scmp.lt.s32.totalorder %s319, 11
      %s321 = scalar_select %p320, %s319, 11
      %s322 = smul.addr %s321, 8
      %s323 = scalar_lea.vmem %s9, %s322
      %s324 = smul.u32 4, %s20
      %p325 = scmp.lt.s32.totalorder %s324, 11
      %s326 = scalar_select %p325, %s324, 11
      %s327 = smul.addr %s326, 8
      %s328 = scalar_lea.vmem %s0, %s327
      %s329 = smul.u32 4, %s20
      %s330 = smul.u32 4, %s20
      %p331 = scmp.lt.s32.totalorder %s330, 11
      %s332 = scalar_select %p331, %s330, 11
      %s333 = smul.addr %s332, 8
      %s334 = scalar_lea.vmem %s9, %s333
      %s335 = smul.u32 4, %s20
      %v336 = vld [vmem:[%s328] sm:$0xff]
      %v337 = vld [vmem:[%s328 + $0x8] sm:$0xff]
      %v338 = vld [vmem:[%s328 + $0x10] sm:$0xff]
      %v339 = vld [vmem:[%s328 + $0x18] sm:$0xff]
      %vm340 = vcmask 523264
      %v341 = vsel %vm340, %v336, 0.0
      %342 = vadd.xlane.f32.xlu0 %v341
      %v343 = vpop.xlane.xlu0 %342
      %v344 = vsel %vm340, %v337, 0.0
      %345 = vadd.xlane.f32.xlu0 %v344
      %v346 = vpop.xlane.xlu0 %345
      %v347 = vsel %vm340, %v338, 0.0
      %348 = vadd.xlane.f32.xlu0 %v347
      %v349 = vpop.xlane.xlu0 %348
      %v350 = vsel %vm340, %v339, 0.0
      %351 = vadd.xlane.f32.xlu0 %v350
      %v352 = vpop.xlane.xlu0 %351
      %v353 = vrcp.pop 64.0
      %v354 = vmul.f32 %v343, %v353
      %v355 = vmul.f32 %v346, %v353
      %v356 = vmul.f32 %v349, %v353
      %v357 = vmul.f32 %v352, %v353
      %v358 = vsub.f32 %v336, %v354
      %v359 = vsub.f32 %v337, %v355
      %v360 = vsub.f32 %v338, %v356
      %v361 = vsub.f32 %v339, %v357
      %v362 = vmul.f32 %v358, %v358
      %v363 = vmul.f32 %v359, %v359
      %v364 = vmul.f32 %v360, %v360
      %v365 = vmul.f32 %v361, %v361
      %v366 = vsel %vm340, %v362, 0.0
      %367 = vadd.xlane.f32.xlu0 %v366
      %v368 = vpop.xlane.xlu0 %367
      %v369 = vsel %vm340, %v363, 0.0
      %370 = vadd.xlane.f32.xlu0 %v369
      %v371 = vpop.xlane.xlu0 %370
      %v372 = vsel %vm340, %v364, 0.0
      %373 = vadd.xlane.f32.xlu0 %v372
      %v374 = vpop.xlane.xlu0 %373
      %v375 = vsel %vm340, %v365, 0.0
      %376 = vadd.xlane.f32.xlu0 %v375
      %v377 = vpop.xlane.xlu0 %376
      %v378 = vmul.f32 %v368, %v353
      %v379 = vmul.f32 %v371, %v353
      %v380 = vmul.f32 %v374, %v353
      %v381 = vmul.f32 %v377, %v353
      %v382 = vadd.f32 %v378, 1e-05
      %v383 = vadd.f32 %v379, 1e-05
      %v384 = vadd.f32 %v380, 1e-05
      %v385 = vadd.f32 %v381, 1e-05
      %v386 = vrsqrt.pop %v382
      %v387 = vrsqrt.pop %v383
      %v388 = vrsqrt.pop %v384
      %v389 = vrsqrt.pop %v385
      %v390 = vmul.f32 %v358, %v386
      %v391 = vmul.f32 %v359, %v387
      %v392 = vmul.f32 %v360, %v388
      %v393 = vmul.f32 %v361, %v389
      %v394 = vld [vmem:[%s1] sm:$0x1]
      %v396 = vlaneseq
      %v397 = vshrl.u32 %v396, 7
      %v398 = vsub.s32 0, %v397
      %v399 = vrot.slane %v394, %v398
      %v401 = vmul.f32 %v390, %v399
      %v402 = vmul.f32 %v391, %v399
      %v403 = vmul.f32 %v392, %v399
      %v404 = vmul.f32 %v393, %v399
      %v405 = vld [vmem:[%s2] sm:$0x1]
      %v407 = vlaneseq
      %v408 = vshrl.u32 %v407, 7
      %v409 = vsub.s32 0, %v408
      %v410 = vrot.slane %v405, %v409
      %v412 = vadd.f32 %v401, %v410
      %v413 = vadd.f32 %v402, %v410
      %v414 = vadd.f32 %v403, %v410
      %v415 = vadd.f32 %v404, %v410
      %v416 = vld [vmem:[%s3] sm:$0xff]
      %v417 = vld [vmem:[%s3 + $0x8] sm:$0xff]
      %v418 = vld [vmem:[%s3 + $0x10] sm:$0xff]
      %v419 = vld [vmem:[%s3 + $0x18] sm:$0xff]
      %v420 = vld [vmem:[%s3 + $0x20] sm:$0xff]
      %v421 = vld [vmem:[%s3 + $0x28] sm:$0xff]
      %v422 = vld [vmem:[%s3 + $0x30] sm:$0xff]
      %v423 = vld [vmem:[%s3 + $0x38] sm:$0xff]
      %v424 = vld [vmem:[%s4] sm:$0x1]
      %v426 = vlaneseq
      %v427 = vshrl.u32 %v426, 7
      %v428 = vsub.s32 0, %v427
      %v429 = vrot.slane %v424, %v428
      %v432 = vsel %vm340, %v412, 0
      %v435 = vsel %vm340, %v413, 0
      %v438 = vsel %vm340, %v414, 0
      %v441 = vsel %vm340, %v415, 0
      %443 = vmatprep.subr.mxu0 0.0
      %444 = vmatpush1.msra.mxu0 0.0
      %445 = vmatprep.subr.mxu0 0.0
      %446 = vmatpush1.msra.mxu0 0.0
      %447 = vmatprep.subr.mxu0 0.0
      %448 = vmatpush1.msra.mxu0 0.0
      %449 = vmatprep.subr.mxu0 0.0
      %450 = vmatpush1.msra.mxu0 0.0
      %451 = vmatprep.subr.mxu0 0.0
      %452 = vmatpush1.msra.mxu0 0.0
      %453 = vmatprep.subr.mxu0 0.0
      %454 = vmatpush1.msra.mxu0 0.0
      %455 = vmatprep.subr.mxu0 0.0
      %456 = vmatpush1.msra.mxu0 0.0
      %457 = vmatprep.subr.mxu0 0.0
      %458 = vmatpush1.msra.mxu0 0.0
      %459 = vmatprep.subr.mxu0 0.0
      %460 = vmatpush1.msra.mxu0 %v423
      %461 = vmatprep.subr.mxu0 0.0
      %462 = vmatpush1.msra.mxu0 %v422
      %463 = vmatprep.subr.mxu0 0.0
      %464 = vmatpush1.msra.mxu0 %v421
      %465 = vmatprep.subr.mxu0 0.0
      %466 = vmatpush1.msra.mxu0 %v420
      %467 = vmatprep.subr.mxu0 0.0
      %468 = vmatpush1.msra.mxu0 %v419
      %469 = vmatprep.subr.mxu0 0.0
      %470 = vmatpush1.msra.mxu0 %v418
      %471 = vmatprep.subr.mxu0 0.0
      %472 = vmatpush1.msra.mxu0 %v417
      %473 = vmatprep.subr.mxu0 0.0
      %474 = vmatpush1.msra.mxu0 %v416
      %475 = vmatprep.subr.mxu0 0.0
      %476 = vmatpush2.msra.mxu0 0.0
      %477 = vmatprep.subr.mxu0 0.0
      %478 = vmatpush2.msra.mxu0 0.0
      %479 = vmatprep.subr.mxu0 0.0
      %480 = vmatpush2.msra.mxu0 0.0
      %481 = vmatprep.subr.mxu0 0.0
      %482 = vmatpush2.msra.mxu0 0.0
      %483 = vmatprep.subr.mxu0 0.0
      %484 = vmatpush2.msra.mxu0 0.0
      %485 = vmatprep.subr.mxu0 0.0
      %486 = vmatpush2.msra.mxu0 0.0
      %487 = vmatprep.subr.mxu0 0.0
      %488 = vmatpush2.msra.mxu0 0.0
      %489 = vmatprep.subr.mxu0 0.0
      %490 = vmatpush2.msra.mxu0 0.0
      %491 = vmatprep.subr.mxu0 0.0
      %492 = vmatpush2.msra.mxu0 0.0
      %493 = vmatprep.subr.mxu0 0.0
      %494 = vmatpush2.msra.mxu0 0.0
      %495 = vmatprep.subr.mxu0 0.0
      %496 = vmatpush2.msra.mxu0 0.0
      %497 = vmatprep.subr.mxu0 0.0
      %498 = vmatpush2.msra.mxu0 0.0
      %499 = vmatprep.subr.mxu0 0.0
      %500 = vmatpush2.msra.mxu0 0.0
      %501 = vmatprep.subr.mxu0 0.0
      %502 = vmatpush2.msra.mxu0 0.0
      %503 = vmatprep.subr.mxu0 0.0
      %504 = vmatpush2.msra.mxu0 0.0
      %505 = vmatprep.subr.mxu0 0.0
      %506 = vmatpush2.msra.mxu0 0.0
      %507 = vmatprep.mubr.f32.mxu0 0.0
      %508 = vmatmul.mubr.f32.gmra.mxu0 %v432
      %v509 = vpop.f32.mrf.mxu0
      %v510 = vadd.f32 %v429, %v509
      %v511 = vpop.f32.mrf.mxu0
      %512 = vmatprep.mubr.f32.mxu0 0.0
      %513 = vmatmul.mubr.f32.gmra.mxu0 %v435
      %v514 = vpop.f32.mrf.mxu0
      %v515 = vadd.f32 %v429, %v514
      %v516 = vpop.f32.mrf.mxu0
      %517 = vmatprep.mubr.f32.mxu0 0.0
      %518 = vmatmul.mubr.f32.gmra.mxu0 %v438
      %v519 = vpop.f32.mrf.mxu0
      %v520 = vadd.f32 %v429, %v519
      %v521 = vpop.f32.mrf.mxu0
      %522 = vmatprep.mubr.f32.mxu0 0.0
      %523 = vmatmul.mubr.f32.gmra.mxu0 %v441
      %v524 = vpop.f32.mrf.mxu0
      %v525 = vadd.f32 %v429, %v524
      %v526 = vpop.f32.mrf.mxu0
      %527 = vdwg.mxu0
      %v528 = vmax.f32 %v510, 0.0
      %v529 = vmax.f32 %v515, 0.0
      %v530 = vmax.f32 %v520, 0.0
      %v531 = vmax.f32 %v525, 0.0
      %v532 = vld [vmem:[%s5] sm:$0xff]
      %v533 = vld [vmem:[%s5 + $0x8] sm:$0xff]
      %v534 = vld [vmem:[%s5 + $0x10] sm:$0xff]
      %v535 = vld [vmem:[%s5 + $0x18] sm:$0xff]
      %v536 = vld [vmem:[%s5 + $0x20] sm:$0xff]
      %v537 = vld [vmem:[%s5 + $0x28] sm:$0xff]
      %v538 = vld [vmem:[%s5 + $0x30] sm:$0xff]
      %v539 = vld [vmem:[%s5 + $0x38] sm:$0xff]
      %v540 = vld [vmem:[%s5 + $0x40] sm:$0xff]
      %v541 = vld [vmem:[%s5 + $0x48] sm:$0xff]
      %v542 = vld [vmem:[%s5 + $0x50] sm:$0xff]
      %v543 = vld [vmem:[%s5 + $0x58] sm:$0xff]
      %v544 = vld [vmem:[%s5 + $0x60] sm:$0xff]
      %v545 = vld [vmem:[%s5 + $0x68] sm:$0xff]
      %v546 = vld [vmem:[%s5 + $0x70] sm:$0xff]
      %v547 = vld [vmem:[%s5 + $0x78] sm:$0xff]
      %v548 = vld [vmem:[%s6] sm:$0x1]
      %v550 = vlaneseq
      %v551 = vshrl.u32 %v550, 7
      %v552 = vsub.s32 0, %v551
      %v553 = vrot.slane %v548, %v552
      %555 = vmatprep.subr.mxu0 0.0
      %556 = vmatpush1.msra.mxu0 %v547
      %557 = vmatprep.subr.mxu0 0.0
      %558 = vmatpush1.msra.mxu0 %v546
      %559 = vmatprep.subr.mxu0 0.0
      %560 = vmatpush1.msra.mxu0 %v545
      %561 = vmatprep.subr.mxu0 0.0
      %562 = vmatpush1.msra.mxu0 %v544
      %563 = vmatprep.subr.mxu0 0.0
      %564 = vmatpush1.msra.mxu0 %v543
      %565 = vmatprep.subr.mxu0 0.0
      %566 = vmatpush1.msra.mxu0 %v542
      %567 = vmatprep.subr.mxu0 0.0
      %568 = vmatpush1.msra.mxu0 %v541
      %569 = vmatprep.subr.mxu0 0.0
      %570 = vmatpush1.msra.mxu0 %v540
      %571 = vmatprep.subr.mxu0 0.0
      %572 = vmatpush1.msra.mxu0 %v539
      %573 = vmatprep.subr.mxu0 0.0
      %574 = vmatpush1.msra.mxu0 %v538
      %575 = vmatprep.subr.mxu0 0.0
      %576 = vmatpush1.msra.mxu0 %v537
      %577 = vmatprep.subr.mxu0 0.0
      %578 = vmatpush1.msra.mxu0 %v536
      %579 = vmatprep.subr.mxu0 0.0
      %580 = vmatpush1.msra.mxu0 %v535
      %581 = vmatprep.subr.mxu0 0.0
      %582 = vmatpush1.msra.mxu0 %v534
      %583 = vmatprep.subr.mxu0 0.0
      %584 = vmatpush1.msra.mxu0 %v533
      %585 = vmatprep.subr.mxu0 0.0
      %586 = vmatpush1.msra.mxu0 %v532
      %587 = vmatprep.subr.mxu0 0.0
      %588 = vmatpush2.msra.mxu0 0.0
      %589 = vmatprep.subr.mxu0 0.0
      %590 = vmatpush2.msra.mxu0 0.0
      %591 = vmatprep.subr.mxu0 0.0
      %592 = vmatpush2.msra.mxu0 0.0
      %593 = vmatprep.subr.mxu0 0.0
      %594 = vmatpush2.msra.mxu0 0.0
      %595 = vmatprep.subr.mxu0 0.0
      %596 = vmatpush2.msra.mxu0 0.0
      %597 = vmatprep.subr.mxu0 0.0
      %598 = vmatpush2.msra.mxu0 0.0
      %599 = vmatprep.subr.mxu0 0.0
      %600 = vmatpush2.msra.mxu0 0.0
      %601 = vmatprep.subr.mxu0 0.0
      %602 = vmatpush2.msra.mxu0 0.0
      %603 = vmatprep.subr.mxu0 0.0
      %604 = vmatpush2.msra.mxu0 0.0
      %605 = vmatprep.subr.mxu0 0.0
      %606 = vmatpush2.msra.mxu0 0.0
      %607 = vmatprep.subr.mxu0 0.0
      %608 = vmatpush2.msra.mxu0 0.0
      %609 = vmatprep.subr.mxu0 0.0
      %610 = vmatpush2.msra.mxu0 0.0
      %611 = vmatprep.subr.mxu0 0.0
      %612 = vmatpush2.msra.mxu0 0.0
      %613 = vmatprep.subr.mxu0 0.0
      %614 = vmatpush2.msra.mxu0 0.0
      %615 = vmatprep.subr.mxu0 0.0
      %616 = vmatpush2.msra.mxu0 0.0
      %617 = vmatprep.subr.mxu0 0.0
      %618 = vmatpush2.msra.mxu0 0.0
      %619 = vmatprep.mubr.f32.mxu0 0.0
      %620 = vmatmul.mubr.f32.gmra.mxu0 %v528
      %v621 = vpop.f32.mrf.mxu0
      %v622 = vadd.f32 %v553, %v621
      %v623 = vpop.f32.mrf.mxu0
      %624 = vmatprep.mubr.f32.mxu0 0.0
      %625 = vmatmul.mubr.f32.gmra.mxu0 %v529
      %v626 = vpop.f32.mrf.mxu0
      %v627 = vadd.f32 %v553, %v626
      %v628 = vpop.f32.mrf.mxu0
      %629 = vmatprep.mubr.f32.mxu0 0.0
      %630 = vmatmul.mubr.f32.gmra.mxu0 %v530
      %v631 = vpop.f32.mrf.mxu0
      %v632 = vadd.f32 %v553, %v631
      %v633 = vpop.f32.mrf.mxu0
      %634 = vmatprep.mubr.f32.mxu0 0.0
      %635 = vmatmul.mubr.f32.gmra.mxu0 %v531
      %v636 = vpop.f32.mrf.mxu0
      %v637 = vadd.f32 %v553, %v636
      %v638 = vpop.f32.mrf.mxu0
      %639 = vdwg.mxu0
      %v640 = vmax.f32 %v622, 0.0
      %v641 = vmax.f32 %v627, 0.0
      %v642 = vmax.f32 %v632, 0.0
      %v643 = vmax.f32 %v637, 0.0
      %v644 = vld [vmem:[%s7] sm:$0xff]
      %v645 = vld [vmem:[%s7 + $0x8] sm:$0xff]
      %v646 = vld [vmem:[%s7 + $0x10] sm:$0xff]
      %v647 = vld [vmem:[%s7 + $0x18] sm:$0xff]
      %v648 = vld [vmem:[%s7 + $0x20] sm:$0xff]
      %v649 = vld [vmem:[%s7 + $0x28] sm:$0xff]
      %v650 = vld [vmem:[%s7 + $0x30] sm:$0xff]
      %v651 = vld [vmem:[%s7 + $0x38] sm:$0xff]
      %v652 = vld [vmem:[%s7 + $0x40] sm:$0xff]
      %v653 = vld [vmem:[%s7 + $0x48] sm:$0xff]
      %v654 = vld [vmem:[%s7 + $0x50] sm:$0xff]
      %v655 = vld [vmem:[%s7 + $0x58] sm:$0xff]
      %v656 = vld [vmem:[%s7 + $0x60] sm:$0xff]
      %v657 = vld [vmem:[%s7 + $0x68] sm:$0xff]
      %v658 = vld [vmem:[%s7 + $0x70] sm:$0xff]
      %v659 = vld [vmem:[%s7 + $0x78] sm:$0xff]
      %v660 = vld [vmem:[%s8] sm:$0x1]
      %v662 = vlaneseq
      %v663 = vshrl.u32 %v662, 7
      %v664 = vsub.s32 0, %v663
      %v665 = vrot.slane %v660, %v664
      %667 = vmatprep.subr.mxu0 0.0
      %668 = vmatpush1.msra.mxu0 %v659
      %669 = vmatprep.subr.mxu0 0.0
      %670 = vmatpush1.msra.mxu0 %v658
      %671 = vmatprep.subr.mxu0 0.0
      %672 = vmatpush1.msra.mxu0 %v657
      %673 = vmatprep.subr.mxu0 0.0
      %674 = vmatpush1.msra.mxu0 %v656
      %675 = vmatprep.subr.mxu0 0.0
      %676 = vmatpush1.msra.mxu0 %v655
      %677 = vmatprep.subr.mxu0 0.0
      %678 = vmatpush1.msra.mxu0 %v654
      %679 = vmatprep.subr.mxu0 0.0
      %680 = vmatpush1.msra.mxu0 %v653
      %681 = vmatprep.subr.mxu0 0.0
      %682 = vmatpush1.msra.mxu0 %v652
      %683 = vmatprep.subr.mxu0 0.0
      %684 = vmatpush1.msra.mxu0 %v651
      %685 = vmatprep.subr.mxu0 0.0
      %686 = vmatpush1.msra.mxu0 %v650
      %687 = vmatprep.subr.mxu0 0.0
      %688 = vmatpush1.msra.mxu0 %v649
      %689 = vmatprep.subr.mxu0 0.0
      %690 = vmatpush1.msra.mxu0 %v648
      %691 = vmatprep.subr.mxu0 0.0
      %692 = vmatpush1.msra.mxu0 %v647
      %693 = vmatprep.subr.mxu0 0.0
      %694 = vmatpush1.msra.mxu0 %v646
      %695 = vmatprep.subr.mxu0 0.0
      %696 = vmatpush1.msra.mxu0 %v645
      %697 = vmatprep.subr.mxu0 0.0
      %698 = vmatpush1.msra.mxu0 %v644
      %699 = vmatprep.subr.mxu0 0.0
      %700 = vmatpush2.msra.mxu0 0.0
      %701 = vmatprep.subr.mxu0 0.0
      %702 = vmatpush2.msra.mxu0 0.0
      %703 = vmatprep.subr.mxu0 0.0
      %704 = vmatpush2.msra.mxu0 0.0
      %705 = vmatprep.subr.mxu0 0.0
      %706 = vmatpush2.msra.mxu0 0.0
      %707 = vmatprep.subr.mxu0 0.0
      %708 = vmatpush2.msra.mxu0 0.0
      %709 = vmatprep.subr.mxu0 0.0
      %710 = vmatpush2.msra.mxu0 0.0
      %711 = vmatprep.subr.mxu0 0.0
      %712 = vmatpush2.msra.mxu0 0.0
      %713 = vmatprep.subr.mxu0 0.0
      %714 = vmatpush2.msra.mxu0 0.0
      %715 = vmatprep.subr.mxu0 0.0
      %716 = vmatpush2.msra.mxu0 0.0
      %717 = vmatprep.subr.mxu0 0.0
      %718 = vmatpush2.msra.mxu0 0.0
      %719 = vmatprep.subr.mxu0 0.0
      %720 = vmatpush2.msra.mxu0 0.0
      %721 = vmatprep.subr.mxu0 0.0
      %722 = vmatpush2.msra.mxu0 0.0
      %723 = vmatprep.subr.mxu0 0.0
      %724 = vmatpush2.msra.mxu0 0.0
      %725 = vmatprep.subr.mxu0 0.0
      %726 = vmatpush2.msra.mxu0 0.0
      %727 = vmatprep.subr.mxu0 0.0
      %728 = vmatpush2.msra.mxu0 0.0
      %729 = vmatprep.subr.mxu0 0.0
      %730 = vmatpush2.msra.mxu0 0.0
      %731 = vmatprep.mubr.f32.mxu0 0.0
      %732 = vmatmul.mubr.f32.gmra.mxu0 %v640
      %v733 = vpop.f32.mrf.mxu0
      %v734 = vadd.f32 %v665, %v733
      %v735 = vpop.f32.mrf.mxu0
      %736 = vmatprep.mubr.f32.mxu0 0.0
      %737 = vmatmul.mubr.f32.gmra.mxu0 %v641
      %v738 = vpop.f32.mrf.mxu0
      %v739 = vadd.f32 %v665, %v738
      %v740 = vpop.f32.mrf.mxu0
      %741 = vmatprep.mubr.f32.mxu0 0.0
      %742 = vmatmul.mubr.f32.gmra.mxu0 %v642
      %v743 = vpop.f32.mrf.mxu0
      %v744 = vadd.f32 %v665, %v743
      %v745 = vpop.f32.mrf.mxu0
      %746 = vmatprep.mubr.f32.mxu0 0.0
      %747 = vmatmul.mubr.f32.gmra.mxu0 %v643
      %v748 = vpop.f32.mrf.mxu0
      %v749 = vadd.f32 %v665, %v748
      %v750 = vpop.f32.mrf.mxu0
      %751 = vdwg.mxu0
      %752 = vst.msk [vmem:[%s334] sm:$0xff] %vm340, %v734
      %753 = vst.msk [vmem:[%s334 + $0x8] sm:$0xff] %vm340, %v739
      %754 = vst.msk [vmem:[%s334 + $0x10] sm:$0xff] %vm340, %v744
      %755 = vst.msk [vmem:[%s334 + $0x18] sm:$0xff] %vm340, %v749
      %s756 = smul.u32 4, %s20
      %p757 = scmp.lt.s32.totalorder %s756, 11
      %s758 = scalar_select %p757, %s756, 11
      %s759 = smul.addr %s758, 8
      %s760 = scalar_lea.vmem %s9, %s759
      // Predicated region
      $region57: #{tpu_custom_call.1} parent=55 // pred_check
        %p761 = pneg %p232
      $region58: #{tpu_custom_call.1} parent=55 // pred_check_branch
        %763 = sbr.rel (%p761) target = $region60
      $region59: #{tpu_custom_call.1} parent=55 // pred_region
        %s764 = smul.u32 4, %s20
      $region60: #{tpu_custom_call.1} parent=55 // pred_fallthru
        _
    $region56: #{tpu_custom_call.1} parent=5 // pred_fallthru
      _
    %p765 = scmp.le.s32.totalorder 2, %s15
    // Predicated region
    $region61: #{tpu_custom_call.1} parent=5 // pred_check
      %p766 = pneg %p765
    $region62: #{tpu_custom_call.1} parent=5 // pred_check_branch
      %768 = sbr.rel (%p766) target = $region64
    $region63: #{tpu_custom_call.1} parent=5 // pred_region
      %s769 = ssub.s32 %s15, 2
      // Predicated region
      $region65: #{tpu_custom_call.1} parent=63 // pred_check
        %p770 = pneg %p238
      $region66: #{tpu_custom_call.1} parent=63 // pred_check_branch
        %772 = sbr.rel (%p770) target = $region68
      $region67: #{tpu_custom_call.1} parent=63 // pred_region
        %s773 = smul.u32 4, %s21
        %p774 = scmp.lt.s32.totalorder %s773, 11
        %s775 = scalar_select %p774, %s773, 11
        %s776 = smul.addr %s775, 8
        %s777 = scalar_lea.vmem %s9, %s776
      $region68: #{tpu_custom_call.1} parent=63 // pred_fallthru
        _
    $region64: #{tpu_custom_call.1} parent=5 // pred_fallthru
      _
  $region6: #{tpu_custom_call.1} parent=0 // loop_footer
    %s19 = sadd.s32 1, %s15
  $region7: #{tpu_custom_call.1} parent=0 // loop_footer_branch
    %14 = sbr.rel target = $region3
  $region8: #{tpu_custom_call.1} parent=0 // loop_exit
    _

</llo_original>
